<compile_context>
chip_gen: v7x
topology: tpu7x:2x2x1
jax: 0.10.0
libtpu: 0.0.40
codegen_flags: <defaults>
</compile_context>

<pallas_src>
import jax
import jax.numpy as jnp
from jax import lax
from jax.experimental import pallas as pl
from jax.experimental.pallas import tpu as pltpu


def residual_linear_kernel(xk_ref, w_ref, xfull_ref, b_ref, o_ref, acc_ref):
    # xk_ref   : (tm, tk)     K-slice of the x row tile (matmul operand)
    # w_ref    : (Dp, tk)     K-slice of the Linear weight (out_features x in_features)
    # xfull_ref: (tm, Dp)     full x row tile (residual add, resident across k)
    # b_ref    : (1,  Dp)     bias
    # o_ref    : (tm, Dp)     output tile
    # acc_ref  : (tm, Dp) f32 accumulator scratch
    k = pl.program_id(1)

    @pl.when(k == 0)
    def _():
        # Fold the bias into the accumulator init (one broadcast per row tile).
        acc_ref[...] = jnp.broadcast_to(
            b_ref[...].astype(jnp.float32), acc_ref.shape
        )

    # Partial matmul: contract x's K slice against w's K slice (w's 2nd axis),
    # i.e. x @ W^T without materializing a transposed weight.  MXU, f32 acc.
    acc_ref[...] += lax.dot_general(
        xk_ref[...],
        w_ref[...],
        dimension_numbers=(((1,), (1,)), ((), ())),
        preferred_element_type=jnp.float32,
    )

    @pl.when(k == pl.num_programs(1) - 1)
    def _():
        out = acc_ref[...] + xfull_ref[...].astype(jnp.float32)
        o_ref[...] = out.astype(o_ref.dtype)


def residual_linear(x, w, b, *, tm=256, tk=512):
    """out = x @ w.T + b + x, fused in one Pallas kernel.

    x: (B, S, D)
    w: (D, D)   torch.nn.Linear layout (out_features, in_features)
    b: (D,)
    """
    B, S, D = x.shape
    M = B * S
    dtype = x.dtype
    w = w.astype(dtype)
    b = b.astype(dtype)

    # Lane-dense layout: pad D up to a multiple of 128; pad M up to tm.
    D_pad = pl.cdiv(D, 128) * 128
    M_pad = pl.cdiv(M, tm) * tm

    x2 = x.reshape(M, D)
    if D_pad != D:
        x2 = jnp.pad(x2, ((0, 0), (0, D_pad - D)))
        w = jnp.pad(w, ((0, D_pad - D), (0, D_pad - D)))
        b = jnp.pad(b, ((0, D_pad - D),))
    if M_pad != M:
        x2 = jnp.pad(x2, ((0, M_pad - M), (0, 0)))
    b2 = b.reshape(1, D_pad)

    # Pick a K tile that divides D_pad (D_pad is a multiple of 128).
    tk = min(tk, D_pad)
    while D_pad % tk != 0:
        tk //= 2

    grid = (M_pad // tm, D_pad // tk)
    itemsize = jnp.dtype(dtype).itemsize
    cost = pl.CostEstimate(
        flops=2 * M_pad * D_pad * D_pad,
        transcendentals=0,
        bytes_accessed=(3 * M_pad * D_pad + grid[0] * D_pad * D_pad + D_pad)
        * itemsize,
    )

    out2 = pl.pallas_call(
        residual_linear_kernel,
        out_shape=jax.ShapeDtypeStruct((M_pad, D_pad), dtype),
        grid_spec=pltpu.PrefetchScalarGridSpec(
            num_scalar_prefetch=0,
            grid=grid,
            in_specs=[
                pl.BlockSpec((tm, tk), lambda i, k: (i, k)),       # x K-slice
                pl.BlockSpec((D_pad, tk), lambda i, k: (0, k)),    # w K-slice
                pl.BlockSpec((tm, D_pad), lambda i, k: (i, 0)),    # x full row tile
                pl.BlockSpec((1, D_pad), lambda i, k: (0, 0)),     # bias (resident)
            ],
            out_specs=pl.BlockSpec((tm, D_pad), lambda i, k: (i, 0)),
            scratch_shapes=[pltpu.VMEM((tm, D_pad), jnp.float32)],
        ),
        compiler_params=pltpu.CompilerParams(
            dimension_semantics=("parallel", "arbitrary"),
            vmem_limit_bytes=64 * 1024 * 1024,
        ),
        cost_estimate=cost,
    )(x2, w, x2, b2)

    return out2[:M, :D].reshape(B, S, D)


if __name__ == "__main__":
    B, S, D = 2, 8, 32

    key = jax.random.PRNGKey(0)
    kx, kw, kb = jax.random.split(key, 3)

    x = jax.random.normal(kx, (B, S, D), dtype=jnp.float32)
    # Deterministic parameter init (matches nn.Linear(D, D) shapes).
    w = jax.random.normal(kw, (D, D), dtype=jnp.float32) * (1.0 / jnp.sqrt(D))
    b = jax.random.normal(kb, (D,), dtype=jnp.float32) * 0.01

    out = residual_linear(x, w, b)
    out = jax.block_until_ready(out)

    # Reference: fn(x) + x with fn = Linear (y = x @ W^T + b).
    ref = jnp.einsum("bsd,ed->bse", x, w, precision=lax.Precision.HIGHEST) + b + x
    assert out.shape == (B, S, D)
    assert jnp.allclose(out, ref, atol=1e-4, rtol=1e-4), float(
        jnp.max(jnp.abs(out - ref))
    )

    print("KERNEL_OK")
</pallas_src>

<mosaic_0001>
module attributes {stable_mosaic.version = 11 : i64} {
  func.func @residual_linear_kernel(%arg0: i32, %arg1: i32, %arg2: memref<256x128xf32, #tpu.memory_space<vmem>>, %arg3: memref<128x128xf32, #tpu.memory_space<vmem>>, %arg4: memref<256x128xf32, #tpu.memory_space<vmem>>, %arg5: memref<1x128xf32, #tpu.memory_space<vmem>>, %arg6: memref<256x128xf32, #tpu.memory_space<vmem>>, %arg7: memref<256x128xf32, #tpu.memory_space<vmem>>) attributes {dimension_semantics = [#tpu.dimension_semantics<parallel>, #tpu.dimension_semantics<arbitrary>], iteration_bounds = array<i64: 1, 1>, scalar_prefetch = 0 : i64, scratch_operands = 1 : i64, tpu.core_type = #tpu.core_type<tc>, window_params = [{transform_indices = @transform_0, window_bounds = array<i64: 256, 128>}, {transform_indices = @transform_1, window_bounds = array<i64: 128, 128>}, {transform_indices = @transform_2, window_bounds = array<i64: 256, 128>}, {pipeline_mode = #tpu.pipeline_mode<synchronous>, transform_indices = @transform_3, window_bounds = array<i64: 1, 128>}, {transform_indices = @transform_4, window_bounds = array<i64: 256, 128>}]} {
    %c0_i32 = arith.constant 0 : i32
    %0 = arith.cmpi eq, %arg1, %c0_i32 : i32
    %1 = arith.extui %0 : i1 to i32
    %c0_i32_0 = arith.constant 0 : i32
    %2 = arith.cmpi ne, %1, %c0_i32_0 : i32
    scf.if %2 {
      %c0_10 = arith.constant 0 : index
      %c0_11 = arith.constant 0 : index
      %12 = vector.load %arg5[%c0_10, %c0_11] : memref<1x128xf32, #tpu.memory_space<vmem>>, vector<1x128xf32>
      %13 = vector.shape_cast %12 : vector<1x128xf32> to vector<1x128xf32>
      %14 = vector.broadcast %13 : vector<1x128xf32> to vector<256x128xf32>
      %c0_12 = arith.constant 0 : index
      %c0_13 = arith.constant 0 : index
      %15 = vector.load %arg7[%c0_12, %c0_13] : memref<256x128xf32, #tpu.memory_space<vmem>>, vector<256x128xf32>
      tpu.vector_store %arg7[%c0_12, %c0_13], %14 {strides = array<i32>} : memref<256x128xf32, #tpu.memory_space<vmem>>, vector<256x128xf32>,
    } else {
    }
    %c0 = arith.constant 0 : index
    %c0_1 = arith.constant 0 : index
    %3 = vector.load %arg7[%c0, %c0_1] : memref<256x128xf32, #tpu.memory_space<vmem>>, vector<256x128xf32>
    %c0_2 = arith.constant 0 : index
    %c0_3 = arith.constant 0 : index
    %4 = vector.load %arg2[%c0_2, %c0_3] : memref<256x128xf32, #tpu.memory_space<vmem>>, vector<256x128xf32>
    %c0_4 = arith.constant 0 : index
    %c0_5 = arith.constant 0 : index
    %5 = vector.load %arg3[%c0_4, %c0_5] : memref<128x128xf32, #tpu.memory_space<vmem>>, vector<128x128xf32>
    %cst = arith.constant dense<0.000000e+00> : vector<256x128xf32>
    %6 = tpu.matmul %4, %5, %cst {dimension_numbers = #tpu.dot_dimension_numbers<[1], [1], [0], [0], [0, 0, 1, 0], [], []>} : vector<256x128xf32>, vector<128x128xf32>, vector<256x128xf32> -> vector<256x128xf32>
    %7 = arith.addf %3, %6 : vector<256x128xf32>
    %c0_6 = arith.constant 0 : index
    %c0_7 = arith.constant 0 : index
    %8 = vector.load %arg7[%c0_6, %c0_7] : memref<256x128xf32, #tpu.memory_space<vmem>>, vector<256x128xf32>
    tpu.vector_store %arg7[%c0_6, %c0_7], %7 {strides = array<i32>} : memref<256x128xf32, #tpu.memory_space<vmem>>, vector<256x128xf32>,
    %c0_i32_8 = arith.constant 0 : i32
    %9 = arith.cmpi eq, %arg1, %c0_i32_8 : i32
    %10 = arith.extui %9 : i1 to i32
    %c0_i32_9 = arith.constant 0 : i32
    %11 = arith.cmpi ne, %10, %c0_i32_9 : i32
    scf.if %11 {
      %c0_10 = arith.constant 0 : index
      %c0_11 = arith.constant 0 : index
      %12 = vector.load %arg7[%c0_10, %c0_11] : memref<256x128xf32, #tpu.memory_space<vmem>>, vector<256x128xf32>
      %c0_12 = arith.constant 0 : index
      %c0_13 = arith.constant 0 : index
      %13 = vector.load %arg4[%c0_12, %c0_13] : memref<256x128xf32, #tpu.memory_space<vmem>>, vector<256x128xf32>
      %14 = arith.addf %12, %13 : vector<256x128xf32>
      %c0_14 = arith.constant 0 : index
      %c0_15 = arith.constant 0 : index
      %15 = vector.load %arg6[%c0_14, %c0_15] : memref<256x128xf32, #tpu.memory_space<vmem>>, vector<256x128xf32>
      tpu.vector_store %arg6[%c0_14, %c0_15], %14 {strides = array<i32>} : memref<256x128xf32, #tpu.memory_space<vmem>>, vector<256x128xf32>,
    } else {
    }
    return
  }
  func.func @transform_0(%arg0: i32, %arg1: i32) -> (i32, i32) {
    %c0_i32 = arith.constant 0 : i32
    return %arg0, %arg1 : i32, i32
  }
  func.func @transform_1(%arg0: i32, %arg1: i32) -> (i32, i32) {
    %c0_i32 = arith.constant 0 : i32
    %c0_i32_0 = arith.constant 0 : i32
    return %c0_i32, %arg1 : i32, i32
  }
  func.func @transform_2(%arg0: i32, %arg1: i32) -> (i32, i32) {
    %c0_i32 = arith.constant 0 : i32
    %c0_i32_0 = arith.constant 0 : i32
    return %arg0, %c0_i32 : i32, i32
  }
  func.func @transform_3(%arg0: i32, %arg1: i32) -> (i32, i32) {
    %c0_i32 = arith.constant 0 : i32
    %c0_i32_0 = arith.constant 0 : i32
    %c0_i32_1 = arith.constant 0 : i32
    return %c0_i32, %c0_i32_0 : i32, i32
  }
  func.func @transform_4(%arg0: i32, %arg1: i32) -> (i32, i32) {
    %c0_i32 = arith.constant 0 : i32
    %c0_i32_0 = arith.constant 0 : i32
    return %arg0, %c0_i32 : i32, i32
  }
}

</mosaic_0001>

<llo_original>
// kernel: tpu_custom_call.1
$region0: #{tpu_custom_call.1}
  #allocation0 [shape = 'u32[]', space=smem, size = 0x4, offset = 0x4, fixed_abs, tag = 'smem constant byte address 0x4 - core index']
  #allocation1 [shape = 'u32[144,128]{1,0:T(1,128)}', space=vmem, size = 0x12000, scoped, tag = 'internal scratch']
  #allocation2 [shape = 'f32[256,128]{1,0:T(8,128)}', space=vmem, size = 0x20000, scoped, tag = 'scratch operand']
  %s0 = inlined_call_operand.hbm [shape: f32[256,128], index: 0, kind: input, shape index: {}]
  %s1 = inlined_call_operand.hbm [shape: f32[128,128], index: 1, kind: input, shape index: {}]
  %s2 = inlined_call_operand.hbm [shape: f32[256,128], index: 2, kind: input, shape index: {}]
  %s3 = inlined_call_operand.hbm [shape: f32[1,128], index: 3, kind: input, shape index: {}]
  %s4 = inlined_call_operand.hbm [shape: f32[256,128], index: 4, kind: output, shape index: {}]
  %s5 = sld [smem:[#allocation0]]
  $region50: #{tpu_custom_call.1} parent=0
    _
  %s7 = ssub.s32 1, %s5
  %s8 = scalar_select 0, %s7, %s5
  $region1: #{tpu_custom_call.1} parent=0
    #allocation3 [shape = 'u8[131072]{0}', space=vmem, size = 0x20000, scoped, tag = 'input window, operand 0, single buffered']
    #allocation4 [shape = 's32[1]{0}', space=sflag, size = 0x4, scoped, tag = 'scoped memory for tpu_custom_call.1']
    #allocation5 [shape = 's32[1]{0}', space=sflag, size = 0x4, scoped, tag = 'scoped memory for tpu_custom_call.1']
    #allocation6 [shape = 'u8[65536]{0}', space=vmem, size = 0x10000, scoped, tag = 'input window, operand 1, single buffered']
    #allocation7 [shape = 's32[1]{0}', space=sflag, size = 0x4, scoped, tag = 'scoped memory for tpu_custom_call.1']
    #allocation8 [shape = 'u8[131072]{0}', space=vmem, size = 0x20000, scoped, tag = 'input window, operand 2, single buffered']
    #allocation9 [shape = 'u8[512]{0}', space=vmem, size = 0x400, scoped, tag = 'input window, operand 3, single buffered']
    #allocation10 [shape = 's32[1]{0}', space=sflag, size = 0x4, scoped, tag = 'scoped memory for tpu_custom_call.1']
    #allocation11 [shape = 'u8[131072]{0}', space=vmem, size = 0x20000, scoped, tag = 'output window, operand 0, single buffered']
    %9 = vsyncpa [#allocation4], 0
    %10 = vsyncpa [#allocation7], 0
    %11 = vsyncpa [#allocation10], 0
    %12 = vsyncpa [#allocation5], 0
    // Predicated region
    $region2: #{tpu_custom_call.1} parent=1 // pred_check
      _
    $region3: #{tpu_custom_call.1} parent=1 // pred_check_branch
      %14 = sbr.rel (0) target = $region5
    $region4: #{tpu_custom_call.1} parent=1 // pred_region
      %s16 = ssub.s32 4096, 4096
      %17 = vsyncadd [#allocation4], %s16
      %s18 = sshll.u32 [#allocation3], 4
      %s19 = int_to_ptr.vmem [resolvable:$true] %s18
      %24 = dma.hbm_to_vmem [thread:$0]  %s0, 4096, %s19, [#allocation4], 128, 128, 8
    $region5: #{tpu_custom_call.1} parent=1 // pred_fallthru
      _
    // Predicated region
    $region6: #{tpu_custom_call.1} parent=1 // pred_check
      _
    $region7: #{tpu_custom_call.1} parent=1 // pred_check_branch
      %26 = sbr.rel (0) target = $region9
    $region8: #{tpu_custom_call.1} parent=1 // pred_region
      %s28 = ssub.s32 2048, 2048
      %29 = vsyncadd [#allocation7], %s28
      %s30 = sshll.u32 [#allocation6], 4
      %s31 = int_to_ptr.vmem [resolvable:$true] %s30
      %36 = dma.hbm_to_vmem [thread:$0]  %s1, 2048, %s31, [#allocation7], 128, 128, 8
    $region9: #{tpu_custom_call.1} parent=1 // pred_fallthru
      _
    // Predicated region
    $region10: #{tpu_custom_call.1} parent=1 // pred_check
      _
    $region11: #{tpu_custom_call.1} parent=1 // pred_check_branch
      %38 = sbr.rel (0) target = $region13
    $region12: #{tpu_custom_call.1} parent=1 // pred_region
      %s40 = ssub.s32 4096, 4096
      %41 = vsyncadd [#allocation7], %s40
      %s42 = sshll.u32 [#allocation8], 4
      %s43 = int_to_ptr.vmem [resolvable:$true] %s42
      %48 = dma.hbm_to_vmem [thread:$0]  %s2, 4096, %s43, [#allocation7], 128, 128, 8
    $region13: #{tpu_custom_call.1} parent=1 // pred_fallthru
      _
    // Predicated region
    $region14: #{tpu_custom_call.1} parent=1 // pred_check
      _
    $region15: #{tpu_custom_call.1} parent=1 // pred_check_branch
      %50 = sbr.rel (0) target = $region17
    $region16: #{tpu_custom_call.1} parent=1 // pred_region
      %s52 = ssub.s32 16, 16
      %53 = vsyncadd [#allocation10], %s52
      %s55 = sshll.u32 [#allocation9], 4
      %s56 = int_to_ptr.vmem [resolvable:$true] %s55
      %58 = dma.hbm_to_vmem [thread:$0]  %s3, 16, %s56, [#allocation10]
    $region17: #{tpu_custom_call.1} parent=1 // pred_fallthru
      _
    // Predicated region
    $region18: #{tpu_custom_call.1} parent=1 // pred_check
      _
    $region19: #{tpu_custom_call.1} parent=1 // pred_check_branch
      %60 = sbr.rel (0) target = $region21
    $region20: #{tpu_custom_call.1} parent=1 // pred_region
      %61 = dma.done [#allocation4], 4096
    $region21: #{tpu_custom_call.1} parent=1 // pred_fallthru
      _
    // Predicated region
    $region22: #{tpu_custom_call.1} parent=1 // pred_check
      _
    $region23: #{tpu_custom_call.1} parent=1 // pred_check_branch
      %63 = sbr.rel (0) target = $region25
    $region24: #{tpu_custom_call.1} parent=1 // pred_region
      %64 = dma.done [#allocation7], 2048
    $region25: #{tpu_custom_call.1} parent=1 // pred_fallthru
      _
    // Predicated region
    $region26: #{tpu_custom_call.1} parent=1 // pred_check
      _
    $region27: #{tpu_custom_call.1} parent=1 // pred_check_branch
      %66 = sbr.rel (0) target = $region29
    $region28: #{tpu_custom_call.1} parent=1 // pred_region
      %67 = dma.done [#allocation7], 4096
    $region29: #{tpu_custom_call.1} parent=1 // pred_fallthru
      _
    // Predicated region
    $region30: #{tpu_custom_call.1} parent=1 // pred_check
      _
    $region31: #{tpu_custom_call.1} parent=1 // pred_check_branch
      %69 = sbr.rel (0) target = $region33
    $region32: #{tpu_custom_call.1} parent=1 // pred_region
      %70 = dma.done [#allocation10], 16
    $region33: #{tpu_custom_call.1} parent=1 // pred_fallthru
      _
    %p71 = scmp.eq.s32.totalorder 0, 0
    // Predicated region
    $region34: #{tpu_custom_call.1} parent=1 // pred_check
      %p72 = pneg %p71
    $region35: #{tpu_custom_call.1} parent=1 // pred_check_branch
      %74 = sbr.rel (%p72) target = $region37
    $region36: #{tpu_custom_call.1} parent=1 // pred_region
      %v75 = vld [vmem:[#allocation9] sm:$0x1]
      %v77 = vlaneseq
      %v78 = vshrl.u32 %v77, 7
      %v79 = vsub.s32 0, %v78
      %v80 = vrot.slane %v75, %v79
      %82 = vst [vmem:[#allocation2] sm:$0xff] %v80
      %83 = vst [vmem:[#allocation2 + $0x8] sm:$0xff] %v80
      %84 = vst [vmem:[#allocation2 + $0x10] sm:$0xff] %v80
      %85 = vst [vmem:[#allocation2 + $0x18] sm:$0xff] %v80
      %86 = vst [vmem:[#allocation2 + $0x20] sm:$0xff] %v80
      %87 = vst [vmem:[#allocation2 + $0x28] sm:$0xff] %v80
      %88 = vst [vmem:[#allocation2 + $0x30] sm:$0xff] %v80
      %89 = vst [vmem:[#allocation2 + $0x38] sm:$0xff] %v80
      %90 = vst [vmem:[#allocation2 + $0x40] sm:$0xff] %v80
      %91 = vst [vmem:[#allocation2 + $0x48] sm:$0xff] %v80
      %92 = vst [vmem:[#allocation2 + $0x50] sm:$0xff] %v80
      %93 = vst [vmem:[#allocation2 + $0x58] sm:$0xff] %v80
      %94 = vst [vmem:[#allocation2 + $0x60] sm:$0xff] %v80
      %95 = vst [vmem:[#allocation2 + $0x68] sm:$0xff] %v80
      %96 = vst [vmem:[#allocation2 + $0x70] sm:$0xff] %v80
      %97 = vst [vmem:[#allocation2 + $0x78] sm:$0xff] %v80
      %98 = vst [vmem:[#allocation2 + $0x80] sm:$0xff] %v80
      %99 = vst [vmem:[#allocation2 + $0x88] sm:$0xff] %v80
      %100 = vst [vmem:[#allocation2 + $0x90] sm:$0xff] %v80
      %101 = vst [vmem:[#allocation2 + $0x98] sm:$0xff] %v80
      %102 = vst [vmem:[#allocation2 + $0xa0] sm:$0xff] %v80
      %103 = vst [vmem:[#allocation2 + $0xa8] sm:$0xff] %v80
      %104 = vst [vmem:[#allocation2 + $0xb0] sm:$0xff] %v80
      %105 = vst [vmem:[#allocation2 + $0xb8] sm:$0xff] %v80
      %106 = vst [vmem:[#allocation2 + $0xc0] sm:$0xff] %v80
      %107 = vst [vmem:[#allocation2 + $0xc8] sm:$0xff] %v80
      %108 = vst [vmem:[#allocation2 + $0xd0] sm:$0xff] %v80
      %109 = vst [vmem:[#allocation2 + $0xd8] sm:$0xff] %v80
      %110 = vst [vmem:[#allocation2 + $0xe0] sm:$0xff] %v80
      %111 = vst [vmem:[#allocation2 + $0xe8] sm:$0xff] %v80
      %112 = vst [vmem:[#allocation2 + $0xf0] sm:$0xff] %v80
      %113 = vst [vmem:[#allocation2 + $0xf8] sm:$0xff] %v80
    $region37: #{tpu_custom_call.1} parent=1 // pred_fallthru
      _
    %v114 = vld [vmem:[#allocation2] sm:$0xff]
    %v115 = vld [vmem:[#allocation2 + $0x8] sm:$0xff]
    %v116 = vld [vmem:[#allocation2 + $0x10] sm:$0xff]
    %v117 = vld [vmem:[#allocation2 + $0x18] sm:$0xff]
    %v118 = vld [vmem:[#allocation2 + $0x20] sm:$0xff]
    %v119 = vld [vmem:[#allocation2 + $0x28] sm:$0xff]
    %v120 = vld [vmem:[#allocation2 + $0x30] sm:$0xff]
    %v121 = vld [vmem:[#allocation2 + $0x38] sm:$0xff]
    %v122 = vld [vmem:[#allocation2 + $0x40] sm:$0xff]
    %v123 = vld [vmem:[#allocation2 + $0x48] sm:$0xff]
    %v124 = vld [vmem:[#allocation2 + $0x50] sm:$0xff]
    %v125 = vld [vmem:[#allocation2 + $0x58] sm:$0xff]
    %v126 = vld [vmem:[#allocation2 + $0x60] sm:$0xff]
    %v127 = vld [vmem:[#allocation2 + $0x68] sm:$0xff]
    %v128 = vld [vmem:[#allocation2 + $0x70] sm:$0xff]
    %v129 = vld [vmem:[#allocation2 + $0x78] sm:$0xff]
    %v130 = vld [vmem:[#allocation2 + $0x80] sm:$0xff]
    %v131 = vld [vmem:[#allocation2 + $0x88] sm:$0xff]
    %v132 = vld [vmem:[#allocation2 + $0x90] sm:$0xff]
    %v133 = vld [vmem:[#allocation2 + $0x98] sm:$0xff]
    %v134 = vld [vmem:[#allocation2 + $0xa0] sm:$0xff]
    %v135 = vld [vmem:[#allocation2 + $0xa8] sm:$0xff]
    %v136 = vld [vmem:[#allocation2 + $0xb0] sm:$0xff]
    %v137 = vld [vmem:[#allocation2 + $0xb8] sm:$0xff]
    %v138 = vld [vmem:[#allocation2 + $0xc0] sm:$0xff]
    %v139 = vld [vmem:[#allocation2 + $0xc8] sm:$0xff]
    %v140 = vld [vmem:[#allocation2 + $0xd0] sm:$0xff]
    %v141 = vld [vmem:[#allocation2 + $0xd8] sm:$0xff]
    %v142 = vld [vmem:[#allocation2 + $0xe0] sm:$0xff]
    %v143 = vld [vmem:[#allocation2 + $0xe8] sm:$0xff]
    %v144 = vld [vmem:[#allocation2 + $0xf0] sm:$0xff]
    %v145 = vld [vmem:[#allocation2 + $0xf8] sm:$0xff]
    %v146 = vld [vmem:[#allocation3] sm:$0xff]
    %v147 = vld [vmem:[#allocation3 + $0x8] sm:$0xff]
    %v148 = vld [vmem:[#allocation3 + $0x10] sm:$0xff]
    %v149 = vld [vmem:[#allocation3 + $0x18] sm:$0xff]
    %v150 = vld [vmem:[#allocation3 + $0x20] sm:$0xff]
    %v151 = vld [vmem:[#allocation3 + $0x28] sm:$0xff]
    %v152 = vld [vmem:[#allocation3 + $0x30] sm:$0xff]
    %v153 = vld [vmem:[#allocation3 + $0x38] sm:$0xff]
    %v154 = vld [vmem:[#allocation3 + $0x40] sm:$0xff]
    %v155 = vld [vmem:[#allocation3 + $0x48] sm:$0xff]
    %v156 = vld [vmem:[#allocation3 + $0x50] sm:$0xff]
    %v157 = vld [vmem:[#allocation3 + $0x58] sm:$0xff]
    %v158 = vld [vmem:[#allocation3 + $0x60] sm:$0xff]
    %v159 = vld [vmem:[#allocation3 + $0x68] sm:$0xff]
    %v160 = vld [vmem:[#allocation3 + $0x70] sm:$0xff]
    %v161 = vld [vmem:[#allocation3 + $0x78] sm:$0xff]
    %v162 = vld [vmem:[#allocation3 + $0x80] sm:$0xff]
    %v163 = vld [vmem:[#allocation3 + $0x88] sm:$0xff]
    %v164 = vld [vmem:[#allocation3 + $0x90] sm:$0xff]
    %v165 = vld [vmem:[#allocation3 + $0x98] sm:$0xff]
    %v166 = vld [vmem:[#allocation3 + $0xa0] sm:$0xff]
    %v167 = vld [vmem:[#allocation3 + $0xa8] sm:$0xff]
    %v168 = vld [vmem:[#allocation3 + $0xb0] sm:$0xff]
    %v169 = vld [vmem:[#allocation3 + $0xb8] sm:$0xff]
    %v170 = vld [vmem:[#allocation3 + $0xc0] sm:$0xff]
    %v171 = vld [vmem:[#allocation3 + $0xc8] sm:$0xff]
    %v172 = vld [vmem:[#allocation3 + $0xd0] sm:$0xff]
    %v173 = vld [vmem:[#allocation3 + $0xd8] sm:$0xff]
    %v174 = vld [vmem:[#allocation3 + $0xe0] sm:$0xff]
    %v175 = vld [vmem:[#allocation3 + $0xe8] sm:$0xff]
    %v176 = vld [vmem:[#allocation3 + $0xf0] sm:$0xff]
    %v177 = vld [vmem:[#allocation3 + $0xf8] sm:$0xff]
    %v178 = vld [vmem:[#allocation6] sm:$0xff]
    %v179 = vld [vmem:[#allocation6 + $0x8] sm:$0xff]
    %v180 = vld [vmem:[#allocation6 + $0x10] sm:$0xff]
    %v181 = vld [vmem:[#allocation6 + $0x18] sm:$0xff]
    %v182 = vld [vmem:[#allocation6 + $0x20] sm:$0xff]
    %v183 = vld [vmem:[#allocation6 + $0x28] sm:$0xff]
    %v184 = vld [vmem:[#allocation6 + $0x30] sm:$0xff]
    %v185 = vld [vmem:[#allocation6 + $0x38] sm:$0xff]
    %v186 = vld [vmem:[#allocation6 + $0x40] sm:$0xff]
    %v187 = vld [vmem:[#allocation6 + $0x48] sm:$0xff]
    %v188 = vld [vmem:[#allocation6 + $0x50] sm:$0xff]
    %v189 = vld [vmem:[#allocation6 + $0x58] sm:$0xff]
    %v190 = vld [vmem:[#allocation6 + $0x60] sm:$0xff]
    %v191 = vld [vmem:[#allocation6 + $0x68] sm:$0xff]
    %v192 = vld [vmem:[#allocation6 + $0x70] sm:$0xff]
    %v193 = vld [vmem:[#allocation6 + $0x78] sm:$0xff]
    %194 = vmatprep.subr.mxu0 0.0
    %195 = vmatpush1.xpose.msra.mxu0 %v178
    %196 = vmatprep.subr.mxu0 0.0
    %197 = vmatpush1.xpose.msra.mxu0 %v179
    %198 = vmatprep.subr.mxu0 0.0
    %199 = vmatpush1.xpose.msra.mxu0 %v180
    %200 = vmatprep.subr.mxu0 0.0
    %201 = vmatpush1.xpose.msra.mxu0 %v181
    %202 = vmatprep.subr.mxu0 0.0
    %203 = vmatpush1.xpose.msra.mxu0 %v182
    %204 = vmatprep.subr.mxu0 0.0
    %205 = vmatpush1.xpose.msra.mxu0 %v183
    %206 = vmatprep.subr.mxu0 0.0
    %207 = vmatpush1.xpose.msra.mxu0 %v184
    %208 = vmatprep.subr.mxu0 0.0
    %209 = vmatpush1.xpose.msra.mxu0 %v185
    %210 = vmatprep.subr.mxu0 0.0
    %211 = vmatpush1.xpose.msra.mxu0 %v186
    %212 = vmatprep.subr.mxu0 0.0
    %213 = vmatpush1.xpose.msra.mxu0 %v187
    %214 = vmatprep.subr.mxu0 0.0
    %215 = vmatpush1.xpose.msra.mxu0 %v188
    %216 = vmatprep.subr.mxu0 0.0
    %217 = vmatpush1.xpose.msra.mxu0 %v189
    %218 = vmatprep.subr.mxu0 0.0
    %219 = vmatpush1.xpose.msra.mxu0 %v190
    %220 = vmatprep.subr.mxu0 0.0
    %221 = vmatpush1.xpose.msra.mxu0 %v191
    %222 = vmatprep.subr.mxu0 0.0
    %223 = vmatpush1.xpose.msra.mxu0 %v192
    %224 = vmatprep.subr.mxu0 0.0
    %225 = vmatpush1.xpose.msra.mxu0 %v193
    %226 = vmatprep.subr.mxu0 0.0
    %227 = vmatpush1.xpose.msra.mxu0 0.0
    %228 = vmatprep.subr.mxu0 0.0
    %229 = vmatpush1.xpose.msra.mxu0 0.0
    %230 = vmatprep.subr.mxu0 0.0
    %231 = vmatpush1.xpose.msra.mxu0 0.0
    %232 = vmatprep.subr.mxu0 0.0
    %233 = vmatpush1.xpose.msra.mxu0 0.0
    %234 = vmatprep.subr.mxu0 0.0
    %235 = vmatpush1.xpose.msra.mxu0 0.0
    %236 = vmatprep.subr.mxu0 0.0
    %237 = vmatpush1.xpose.msra.mxu0 0.0
    %238 = vmatprep.subr.mxu0 0.0
    %239 = vmatpush1.xpose.msra.mxu0 0.0
    %240 = vmatprep.subr.mxu0 0.0
    %241 = vmatpush1.xpose.msra.mxu0 0.0
    %242 = vmatprep.subr.mxu0 0.0
    %243 = vmatpush1.xpose.msra.mxu0 0.0
    %244 = vmatprep.subr.mxu0 0.0
    %245 = vmatpush1.xpose.msra.mxu0 0.0
    %246 = vmatprep.subr.mxu0 0.0
    %247 = vmatpush1.xpose.msra.mxu0 0.0
    %248 = vmatprep.subr.mxu0 0.0
    %249 = vmatpush1.xpose.msra.mxu0 0.0
    %250 = vmatprep.subr.mxu0 0.0
    %251 = vmatpush1.xpose.msra.mxu0 0.0
    %252 = vmatprep.subr.mxu0 0.0
    %253 = vmatpush1.xpose.msra.mxu0 0.0
    %254 = vmatprep.subr.mxu0 0.0
    %255 = vmatpush1.xpose.msra.mxu0 0.0
    %256 = vmatprep.subr.mxu0 0.0
    %257 = vmatpush1.xpose.msra.mxu0 0.0
    %258 = vmatprep.mubr.f32.mxu0 0.0
    %259 = vmatmul.mubr.f32.gmra.mrb[0].mxu0 %v146
    %v260 = vpop.f32.mrb[0].mxu0
    %v261 = vadd.f32 0.0, %v260
    %v262 = vpop.f32.mrb[0].mxu0
    %263 = vmatprep.mubr.f32.mxu0 0.0
    %264 = vmatmul.mubr.f32.gmra.mrb[0].mxu0 %v147
    %v265 = vpop.f32.mrb[0].mxu0
    %v266 = vadd.f32 0.0, %v265
    %v267 = vpop.f32.mrb[0].mxu0
    %268 = vmatprep.mubr.f32.mxu0 0.0
    %269 = vmatmul.mubr.f32.gmra.mrb[0].mxu0 %v148
    %v270 = vpop.f32.mrb[0].mxu0
    %v271 = vadd.f32 0.0, %v270
    %v272 = vpop.f32.mrb[0].mxu0
    %273 = vmatprep.mubr.f32.mxu0 0.0
    %274 = vmatmul.mubr.f32.gmra.mrb[0].mxu0 %v149
    %v275 = vpop.f32.mrb[0].mxu0
    %v276 = vadd.f32 0.0, %v275
    %v277 = vpop.f32.mrb[0].mxu0
    %278 = vmatprep.mubr.f32.mxu0 0.0
    %279 = vmatmul.mubr.f32.gmra.mrb[0].mxu0 %v150
    %v280 = vpop.f32.mrb[0].mxu0
    %v281 = vadd.f32 0.0, %v280
    %v282 = vpop.f32.mrb[0].mxu0
    %283 = vmatprep.mubr.f32.mxu0 0.0
    %284 = vmatmul.mubr.f32.gmra.mrb[0].mxu0 %v151
    %v285 = vpop.f32.mrb[0].mxu0
    %v286 = vadd.f32 0.0, %v285
    %v287 = vpop.f32.mrb[0].mxu0
    %288 = vmatprep.mubr.f32.mxu0 0.0
    %289 = vmatmul.mubr.f32.gmra.mrb[0].mxu0 %v152
    %v290 = vpop.f32.mrb[0].mxu0
    %v291 = vadd.f32 0.0, %v290
    %v292 = vpop.f32.mrb[0].mxu0
    %293 = vmatprep.mubr.f32.mxu0 0.0
    %294 = vmatmul.mubr.f32.gmra.mrb[0].mxu0 %v153
    %v295 = vpop.f32.mrb[0].mxu0
    %v296 = vadd.f32 0.0, %v295
    %v297 = vpop.f32.mrb[0].mxu0
    %298 = vmatprep.mubr.f32.mxu0 0.0
    %299 = vmatmul.mubr.f32.gmra.mrb[0].mxu0 %v154
    %v300 = vpop.f32.mrb[0].mxu0
    %v301 = vadd.f32 0.0, %v300
    %v302 = vpop.f32.mrb[0].mxu0
    %303 = vmatprep.mubr.f32.mxu0 0.0
    %304 = vmatmul.mubr.f32.gmra.mrb[0].mxu0 %v155
    %v305 = vpop.f32.mrb[0].mxu0
    %v306 = vadd.f32 0.0, %v305
    %v307 = vpop.f32.mrb[0].mxu0
    %308 = vmatprep.mubr.f32.mxu0 0.0
    %309 = vmatmul.mubr.f32.gmra.mrb[0].mxu0 %v156
    %v310 = vpop.f32.mrb[0].mxu0
    %v311 = vadd.f32 0.0, %v310
    %v312 = vpop.f32.mrb[0].mxu0
    %313 = vmatprep.mubr.f32.mxu0 0.0
    %314 = vmatmul.mubr.f32.gmra.mrb[0].mxu0 %v157
    %v315 = vpop.f32.mrb[0].mxu0
    %v316 = vadd.f32 0.0, %v315
    %v317 = vpop.f32.mrb[0].mxu0
    %318 = vmatprep.mubr.f32.mxu0 0.0
    %319 = vmatmul.mubr.f32.gmra.mrb[0].mxu0 %v158
    %v320 = vpop.f32.mrb[0].mxu0
    %v321 = vadd.f32 0.0, %v320
    %v322 = vpop.f32.mrb[0].mxu0
    %323 = vmatprep.mubr.f32.mxu0 0.0
    %324 = vmatmul.mubr.f32.gmra.mrb[0].mxu0 %v159
    %v325 = vpop.f32.mrb[0].mxu0
    %v326 = vadd.f32 0.0, %v325
    %v327 = vpop.f32.mrb[0].mxu0
    %328 = vmatprep.mubr.f32.mxu0 0.0
    %329 = vmatmul.mubr.f32.gmra.mrb[0].mxu0 %v160
    %v330 = vpop.f32.mrb[0].mxu0
    %v331 = vadd.f32 0.0, %v330
    %v332 = vpop.f32.mrb[0].mxu0
    %333 = vmatprep.mubr.f32.mxu0 0.0
    %334 = vmatmul.mubr.f32.gmra.mrb[0].mxu0 %v161
    %v335 = vpop.f32.mrb[0].mxu0
    %v336 = vadd.f32 0.0, %v335
    %v337 = vpop.f32.mrb[0].mxu0
    %338 = vmatprep.mubr.f32.mxu0 0.0
    %339 = vmatmul.mubr.f32.gmra.mrb[0].mxu0 %v162
    %v340 = vpop.f32.mrb[0].mxu0
    %v341 = vadd.f32 0.0, %v340
    %v342 = vpop.f32.mrb[0].mxu0
    %343 = vmatprep.mubr.f32.mxu0 0.0
    %344 = vmatmul.mubr.f32.gmra.mrb[0].mxu0 %v163
    %v345 = vpop.f32.mrb[0].mxu0
    %v346 = vadd.f32 0.0, %v345
    %v347 = vpop.f32.mrb[0].mxu0
    %348 = vmatprep.mubr.f32.mxu0 0.0
    %349 = vmatmul.mubr.f32.gmra.mrb[0].mxu0 %v164
    %v350 = vpop.f32.mrb[0].mxu0
    %v351 = vadd.f32 0.0, %v350
    %v352 = vpop.f32.mrb[0].mxu0
    %353 = vmatprep.mubr.f32.mxu0 0.0
    %354 = vmatmul.mubr.f32.gmra.mrb[0].mxu0 %v165
    %v355 = vpop.f32.mrb[0].mxu0
    %v356 = vadd.f32 0.0, %v355
    %v357 = vpop.f32.mrb[0].mxu0
    %358 = vmatprep.mubr.f32.mxu0 0.0
    %359 = vmatmul.mubr.f32.gmra.mrb[0].mxu0 %v166
    %v360 = vpop.f32.mrb[0].mxu0
    %v361 = vadd.f32 0.0, %v360
    %v362 = vpop.f32.mrb[0].mxu0
    %363 = vmatprep.mubr.f32.mxu0 0.0
    %364 = vmatmul.mubr.f32.gmra.mrb[0].mxu0 %v167
    %v365 = vpop.f32.mrb[0].mxu0
    %v366 = vadd.f32 0.0, %v365
    %v367 = vpop.f32.mrb[0].mxu0
    %368 = vmatprep.mubr.f32.mxu0 0.0
    %369 = vmatmul.mubr.f32.gmra.mrb[0].mxu0 %v168
    %v370 = vpop.f32.mrb[0].mxu0
    %v371 = vadd.f32 0.0, %v370
    %v372 = vpop.f32.mrb[0].mxu0
    %373 = vmatprep.mubr.f32.mxu0 0.0
    %374 = vmatmul.mubr.f32.gmra.mrb[0].mxu0 %v169
    %v375 = vpop.f32.mrb[0].mxu0
    %v376 = vadd.f32 0.0, %v375
    %v377 = vpop.f32.mrb[0].mxu0
    %378 = vmatprep.mubr.f32.mxu0 0.0
    %379 = vmatmul.mubr.f32.gmra.mrb[0].mxu0 %v170
    %v380 = vpop.f32.mrb[0].mxu0
    %v381 = vadd.f32 0.0, %v380
    %v382 = vpop.f32.mrb[0].mxu0
    %383 = vmatprep.mubr.f32.mxu0 0.0
    %384 = vmatmul.mubr.f32.gmra.mrb[0].mxu0 %v171
    %v385 = vpop.f32.mrb[0].mxu0
    %v386 = vadd.f32 0.0, %v385
    %v387 = vpop.f32.mrb[0].mxu0
    %388 = vmatprep.mubr.f32.mxu0 0.0
    %389 = vmatmul.mubr.f32.gmra.mrb[0].mxu0 %v172
    %v390 = vpop.f32.mrb[0].mxu0
    %v391 = vadd.f32 0.0, %v390
    %v392 = vpop.f32.mrb[0].mxu0
    %393 = vmatprep.mubr.f32.mxu0 0.0
    %394 = vmatmul.mubr.f32.gmra.mrb[0].mxu0 %v173
    %v395 = vpop.f32.mrb[0].mxu0
    %v396 = vadd.f32 0.0, %v395
    %v397 = vpop.f32.mrb[0].mxu0
    %398 = vmatprep.mubr.f32.mxu0 0.0
    %399 = vmatmul.mubr.f32.gmra.mrb[0].mxu0 %v174
    %v400 = vpop.f32.mrb[0].mxu0
    %v401 = vadd.f32 0.0, %v400
    %v402 = vpop.f32.mrb[0].mxu0
    %403 = vmatprep.mubr.f32.mxu0 0.0
    %404 = vmatmul.mubr.f32.gmra.mrb[0].mxu0 %v175
    %v405 = vpop.f32.mrb[0].mxu0
    %v406 = vadd.f32 0.0, %v405
    %v407 = vpop.f32.mrb[0].mxu0
    %408 = vmatprep.mubr.f32.mxu0 0.0
    %409 = vmatmul.mubr.f32.gmra.mrb[0].mxu0 %v176
    %v410 = vpop.f32.mrb[0].mxu0
    %v411 = vadd.f32 0.0, %v410
    %v412 = vpop.f32.mrb[0].mxu0
    %413 = vmatprep.mubr.f32.mxu0 0.0
    %414 = vmatmul.mubr.f32.gmra.mrb[0].mxu0 %v177
    %v415 = vpop.f32.mrb[0].mxu0
    %v416 = vadd.f32 0.0, %v415
    %v417 = vpop.f32.mrb[0].mxu0
    %418 = vdwg.mxu0
    %v419 = vadd.f32 %v114, %v261
    %v420 = vadd.f32 %v115, %v266
    %v421 = vadd.f32 %v116, %v271
    %v422 = vadd.f32 %v117, %v276
    %v423 = vadd.f32 %v118, %v281
    %v424 = vadd.f32 %v119, %v286
    %v425 = vadd.f32 %v120, %v291
    %v426 = vadd.f32 %v121, %v296
    %v427 = vadd.f32 %v122, %v301
    %v428 = vadd.f32 %v123, %v306
    %v429 = vadd.f32 %v124, %v311
    %v430 = vadd.f32 %v125, %v316
    %v431 = vadd.f32 %v126, %v321
    %v432 = vadd.f32 %v127, %v326
    %v433 = vadd.f32 %v128, %v331
    %v434 = vadd.f32 %v129, %v336
    %v435 = vadd.f32 %v130, %v341
    %v436 = vadd.f32 %v131, %v346
    %v437 = vadd.f32 %v132, %v351
    %v438 = vadd.f32 %v133, %v356
    %v439 = vadd.f32 %v134, %v361
    %v440 = vadd.f32 %v135, %v366
    %v441 = vadd.f32 %v136, %v371
    %v442 = vadd.f32 %v137, %v376
    %v443 = vadd.f32 %v138, %v381
    %v444 = vadd.f32 %v139, %v386
    %v445 = vadd.f32 %v140, %v391
    %v446 = vadd.f32 %v141, %v396
    %v447 = vadd.f32 %v142, %v401
    %v448 = vadd.f32 %v143, %v406
    %v449 = vadd.f32 %v144, %v411
    %v450 = vadd.f32 %v145, %v416
    %451 = vst [vmem:[#allocation2] sm:$0xff] %v419
    %452 = vst [vmem:[#allocation2 + $0x8] sm:$0xff] %v420
    %453 = vst [vmem:[#allocation2 + $0x10] sm:$0xff] %v421
    %454 = vst [vmem:[#allocation2 + $0x18] sm:$0xff] %v422
    %455 = vst [vmem:[#allocation2 + $0x20] sm:$0xff] %v423
    %456 = vst [vmem:[#allocation2 + $0x28] sm:$0xff] %v424
    %457 = vst [vmem:[#allocation2 + $0x30] sm:$0xff] %v425
    %458 = vst [vmem:[#allocation2 + $0x38] sm:$0xff] %v426
    %459 = vst [vmem:[#allocation2 + $0x40] sm:$0xff] %v427
    %460 = vst [vmem:[#allocation2 + $0x48] sm:$0xff] %v428
    %461 = vst [vmem:[#allocation2 + $0x50] sm:$0xff] %v429
    %462 = vst [vmem:[#allocation2 + $0x58] sm:$0xff] %v430
    %463 = vst [vmem:[#allocation2 + $0x60] sm:$0xff] %v431
    %464 = vst [vmem:[#allocation2 + $0x68] sm:$0xff] %v432
    %465 = vst [vmem:[#allocation2 + $0x70] sm:$0xff] %v433
    %466 = vst [vmem:[#allocation2 + $0x78] sm:$0xff] %v434
    %467 = vst [vmem:[#allocation2 + $0x80] sm:$0xff] %v435
    %468 = vst [vmem:[#allocation2 + $0x88] sm:$0xff] %v436
    %469 = vst [vmem:[#allocation2 + $0x90] sm:$0xff] %v437
    %470 = vst [vmem:[#allocation2 + $0x98] sm:$0xff] %v438
    %471 = vst [vmem:[#allocation2 + $0xa0] sm:$0xff] %v439
    %472 = vst [vmem:[#allocation2 + $0xa8] sm:$0xff] %v440
    %473 = vst [vmem:[#allocation2 + $0xb0] sm:$0xff] %v441
    %474 = vst [vmem:[#allocation2 + $0xb8] sm:$0xff] %v442
    %475 = vst [vmem:[#allocation2 + $0xc0] sm:$0xff] %v443
    %476 = vst [vmem:[#allocation2 + $0xc8] sm:$0xff] %v444
    %477 = vst [vmem:[#allocation2 + $0xd0] sm:$0xff] %v445
    %478 = vst [vmem:[#allocation2 + $0xd8] sm:$0xff] %v446
    %479 = vst [vmem:[#allocation2 + $0xe0] sm:$0xff] %v447
    %480 = vst [vmem:[#allocation2 + $0xe8] sm:$0xff] %v448
    %481 = vst [vmem:[#allocation2 + $0xf0] sm:$0xff] %v449
    %482 = vst [vmem:[#allocation2 + $0xf8] sm:$0xff] %v450
    // Predicated region
    $region38: #{tpu_custom_call.1} parent=1 // pred_check
      %p483 = pneg %p71
    $region39: #{tpu_custom_call.1} parent=1 // pred_check_branch
      %485 = sbr.rel (%p483) target = $region41
    $region40: #{tpu_custom_call.1} parent=1 // pred_region
      %v486 = vld [vmem:[#allocation2] sm:$0xff]
      %v487 = vld [vmem:[#allocation2 + $0x8] sm:$0xff]
      %v488 = vld [vmem:[#allocation2 + $0x10] sm:$0xff]
      %v489 = vld [vmem:[#allocation2 + $0x18] sm:$0xff]
      %v490 = vld [vmem:[#allocation2 + $0x20] sm:$0xff]
      %v491 = vld [vmem:[#allocation2 + $0x28] sm:$0xff]
      %v492 = vld [vmem:[#allocation2 + $0x30] sm:$0xff]
      %v493 = vld [vmem:[#allocation2 + $0x38] sm:$0xff]
      %v494 = vld [vmem:[#allocation2 + $0x40] sm:$0xff]
      %v495 = vld [vmem:[#allocation2 + $0x48] sm:$0xff]
      %v496 = vld [vmem:[#allocation2 + $0x50] sm:$0xff]
      %v497 = vld [vmem:[#allocation2 + $0x58] sm:$0xff]
      %v498 = vld [vmem:[#allocation2 + $0x60] sm:$0xff]
      %v499 = vld [vmem:[#allocation2 + $0x68] sm:$0xff]
      %v500 = vld [vmem:[#allocation2 + $0x70] sm:$0xff]
      %v501 = vld [vmem:[#allocation2 + $0x78] sm:$0xff]
      %v502 = vld [vmem:[#allocation2 + $0x80] sm:$0xff]
      %v503 = vld [vmem:[#allocation2 + $0x88] sm:$0xff]
      %v504 = vld [vmem:[#allocation2 + $0x90] sm:$0xff]
      %v505 = vld [vmem:[#allocation2 + $0x98] sm:$0xff]
      %v506 = vld [vmem:[#allocation2 + $0xa0] sm:$0xff]
      %v507 = vld [vmem:[#allocation2 + $0xa8] sm:$0xff]
      %v508 = vld [vmem:[#allocation2 + $0xb0] sm:$0xff]
      %v509 = vld [vmem:[#allocation2 + $0xb8] sm:$0xff]
      %v510 = vld [vmem:[#allocation2 + $0xc0] sm:$0xff]
      %v511 = vld [vmem:[#allocation2 + $0xc8] sm:$0xff]
      %v512 = vld [vmem:[#allocation2 + $0xd0] sm:$0xff]
      %v513 = vld [vmem:[#allocation2 + $0xd8] sm:$0xff]
      %v514 = vld [vmem:[#allocation2 + $0xe0] sm:$0xff]
      %v515 = vld [vmem:[#allocation2 + $0xe8] sm:$0xff]
      %v516 = vld [vmem:[#allocation2 + $0xf0] sm:$0xff]
      %v517 = vld [vmem:[#allocation2 + $0xf8] sm:$0xff]
      %v518 = vld [vmem:[#allocation8] sm:$0xff]
      %v519 = vld [vmem:[#allocation8 + $0x8] sm:$0xff]
      %v520 = vld [vmem:[#allocation8 + $0x10] sm:$0xff]
      %v521 = vld [vmem:[#allocation8 + $0x18] sm:$0xff]
      %v522 = vld [vmem:[#allocation8 + $0x20] sm:$0xff]
      %v523 = vld [vmem:[#allocation8 + $0x28] sm:$0xff]
      %v524 = vld [vmem:[#allocation8 + $0x30] sm:$0xff]
      %v525 = vld [vmem:[#allocation8 + $0x38] sm:$0xff]
      %v526 = vld [vmem:[#allocation8 + $0x40] sm:$0xff]
      %v527 = vld [vmem:[#allocation8 + $0x48] sm:$0xff]
      %v528 = vld [vmem:[#allocation8 + $0x50] sm:$0xff]
      %v529 = vld [vmem:[#allocation8 + $0x58] sm:$0xff]
      %v530 = vld [vmem:[#allocation8 + $0x60] sm:$0xff]
      %v531 = vld [vmem:[#allocation8 + $0x68] sm:$0xff]
      %v532 = vld [vmem:[#allocation8 + $0x70] sm:$0xff]
      %v533 = vld [vmem:[#allocation8 + $0x78] sm:$0xff]
      %v534 = vld [vmem:[#allocation8 + $0x80] sm:$0xff]
      %v535 = vld [vmem:[#allocation8 + $0x88] sm:$0xff]
      %v536 = vld [vmem:[#allocation8 + $0x90] sm:$0xff]
      %v537 = vld [vmem:[#allocation8 + $0x98] sm:$0xff]
      %v538 = vld [vmem:[#allocation8 + $0xa0] sm:$0xff]
      %v539 = vld [vmem:[#allocation8 + $0xa8] sm:$0xff]
      %v540 = vld [vmem:[#allocation8 + $0xb0] sm:$0xff]
      %v541 = vld [vmem:[#allocation8 + $0xb8] sm:$0xff]
      %v542 = vld [vmem:[#allocation8 + $0xc0] sm:$0xff]
      %v543 = vld [vmem:[#allocation8 + $0xc8] sm:$0xff]
      %v544 = vld [vmem:[#allocation8 + $0xd0] sm:$0xff]
      %v545 = vld [vmem:[#allocation8 + $0xd8] sm:$0xff]
      %v546 = vld [vmem:[#allocation8 + $0xe0] sm:$0xff]
      %v547 = vld [vmem:[#allocation8 + $0xe8] sm:$0xff]
      %v548 = vld [vmem:[#allocation8 + $0xf0] sm:$0xff]
      %v549 = vld [vmem:[#allocation8 + $0xf8] sm:$0xff]
      %v550 = vadd.f32 %v486, %v518
      %v551 = vadd.f32 %v487, %v519
      %v552 = vadd.f32 %v488, %v520
      %v553 = vadd.f32 %v489, %v521
      %v554 = vadd.f32 %v490, %v522
      %v555 = vadd.f32 %v491, %v523
      %v556 = vadd.f32 %v492, %v524
      %v557 = vadd.f32 %v493, %v525
      %v558 = vadd.f32 %v494, %v526
      %v559 = vadd.f32 %v495, %v527
      %v560 = vadd.f32 %v496, %v528
      %v561 = vadd.f32 %v497, %v529
      %v562 = vadd.f32 %v498, %v530
      %v563 = vadd.f32 %v499, %v531
      %v564 = vadd.f32 %v500, %v532
      %v565 = vadd.f32 %v501, %v533
      %v566 = vadd.f32 %v502, %v534
      %v567 = vadd.f32 %v503, %v535
      %v568 = vadd.f32 %v504, %v536
      %v569 = vadd.f32 %v505, %v537
      %v570 = vadd.f32 %v506, %v538
      %v571 = vadd.f32 %v507, %v539
      %v572 = vadd.f32 %v508, %v540
      %v573 = vadd.f32 %v509, %v541
      %v574 = vadd.f32 %v510, %v542
      %v575 = vadd.f32 %v511, %v543
      %v576 = vadd.f32 %v512, %v544
      %v577 = vadd.f32 %v513, %v545
      %v578 = vadd.f32 %v514, %v546
      %v579 = vadd.f32 %v515, %v547
      %v580 = vadd.f32 %v516, %v548
      %v581 = vadd.f32 %v517, %v549
      %582 = vst [vmem:[#allocation11] sm:$0xff] %v550
      %583 = vst [vmem:[#allocation11 + $0x8] sm:$0xff] %v551
      %584 = vst [vmem:[#allocation11 + $0x10] sm:$0xff] %v552
      %585 = vst [vmem:[#allocation11 + $0x18] sm:$0xff] %v553
      %586 = vst [vmem:[#allocation11 + $0x20] sm:$0xff] %v554
      %587 = vst [vmem:[#allocation11 + $0x28] sm:$0xff] %v555
      %588 = vst [vmem:[#allocation11 + $0x30] sm:$0xff] %v556
      %589 = vst [vmem:[#allocation11 + $0x38] sm:$0xff] %v557
      %590 = vst [vmem:[#allocation11 + $0x40] sm:$0xff] %v558
      %591 = vst [vmem:[#allocation11 + $0x48] sm:$0xff] %v559
      %592 = vst [vmem:[#allocation11 + $0x50] sm:$0xff] %v560
      %593 = vst [vmem:[#allocation11 + $0x58] sm:$0xff] %v561
      %594 = vst [vmem:[#allocation11 + $0x60] sm:$0xff] %v562
      %595 = vst [vmem:[#allocation11 + $0x68] sm:$0xff] %v563
      %596 = vst [vmem:[#allocation11 + $0x70] sm:$0xff] %v564
      %597 = vst [vmem:[#allocation11 + $0x78] sm:$0xff] %v565
      %598 = vst [vmem:[#allocation11 + $0x80] sm:$0xff] %v566
      %599 = vst [vmem:[#allocation11 + $0x88] sm:$0xff] %v567
      %600 = vst [vmem:[#allocation11 + $0x90] sm:$0xff] %v568
      %601 = vst [vmem:[#allocation11 + $0x98] sm:$0xff] %v569
      %602 = vst [vmem:[#allocation11 + $0xa0] sm:$0xff] %v570
      %603 = vst [vmem:[#allocation11 + $0xa8] sm:$0xff] %v571
      %604 = vst [vmem:[#allocation11 + $0xb0] sm:$0xff] %v572
      %605 = vst [vmem:[#allocation11 + $0xb8] sm:$0xff] %v573
      %606 = vst [vmem:[#allocation11 + $0xc0] sm:$0xff] %v574
      %607 = vst [vmem:[#allocation11 + $0xc8] sm:$0xff] %v575
      %608 = vst [vmem:[#allocation11 + $0xd0] sm:$0xff] %v576
      %609 = vst [vmem:[#allocation11 + $0xd8] sm:$0xff] %v577
      %610 = vst [vmem:[#allocation11 + $0xe0] sm:$0xff] %v578
      %611 = vst [vmem:[#allocation11 + $0xe8] sm:$0xff] %v579
      %612 = vst [vmem:[#allocation11 + $0xf0] sm:$0xff] %v580
      %613 = vst [vmem:[#allocation11 + $0xf8] sm:$0xff] %v581
    $region41: #{tpu_custom_call.1} parent=1 // pred_fallthru
      _
    // Predicated region
    $region42: #{tpu_custom_call.1} parent=1 // pred_check
      _
    $region43: #{tpu_custom_call.1} parent=1 // pred_check_branch
      %615 = sbr.rel (0) target = $region45
    $region44: #{tpu_custom_call.1} parent=1 // pred_region
      %s617 = ssub.s32 4096, 4096
      %618 = vsyncadd [#allocation5], %s617
      %s619 = sshll.u32 [#allocation11], 4
      %s620 = int_to_ptr.vmem [resolvable:$true] %s619
      %625 = dma.vmem_to_hbm [thread:$0]  %s620, 4096, %s4, [#allocation5], 128, 128, 8
    $region45: #{tpu_custom_call.1} parent=1 // pred_fallthru
      _
    // Predicated region
    $region46: #{tpu_custom_call.1} parent=1 // pred_check
      _
    $region47: #{tpu_custom_call.1} parent=1 // pred_check_branch
      %627 = sbr.rel (0) target = $region49
    $region48: #{tpu_custom_call.1} parent=1 // pred_region
      %628 = dma.done [#allocation5], 4096
    $region49: #{tpu_custom_call.1} parent=1 // pred_fallthru
      _
    %629 = vsyncpa [#allocation4], 1
    %630 = vsyncpa [#allocation7], 1
    %631 = vsyncpa [#allocation10], 1
    %632 = vsyncpa [#allocation5], 1

</llo_original>
